<compile_context>
chip_gen: v7x
topology: tpu7x:2x2x1
jax: 0.10.0
libtpu: 0.0.40
codegen_flags: <defaults>
</compile_context>

<pallas_src>
import functools

import jax
import jax.numpy as jnp
from jax.experimental import pallas as pl
from jax.experimental.pallas import tpu as pltpu

ALPHA = -0.5
BETA = -0.5

_SUBLANE = 8


def _round_up(n, m):
    return ((n + m - 1) // m) * m


def _cdiv(a, b):
    return (a + b - 1) // b


def _jacobi_recurrence_coeffs(i, a, b):
    # Trace-time Python-float math.  NOTE: divides by (i + a + b) and
    # (2i + a + b - 2); these never vanish for the default a = b = -0.5
    # (a + b = -1).  Arbitrary (a, b) hitting a zero raises at trace time.
    Ai = (2 * i + a + b - 1) * (2 * i + a + b) / (2 * i * (i + a + b))
    Bi = (2 * i + a + b - 1) * (a * a - b * b) / (
        2 * i * (i + a + b) * (2 * i + a + b - 2))
    Ci = -2 * (i + a - 1) * (i + b - 1) * (2 * i + a + b) / (
        2 * i * (i + a + b) * (2 * i + a + b - 2))
    return Ai, Bi, Ci


def _kan_kernel(x_ref, c_ref, bias_ref, o_ref, *, degree, a, b):
    """x_ref: (tb, I) input dtype; c_ref: (max(degree,1), I, O) coeff dtype;
    bias_ref: (1, O) f32; o_ref: (tb, O) out dtype."""
    if degree > 0:
        x = jnp.tanh(x_ref[...].astype(jnp.float32))
        mxu_dtype = c_ref.dtype
        # Recurrence carries stay f32 (bounded, Chebyshev-like for a=b=-0.5);
        # each polynomial is cast to bf16 only as the MXU operand.
        p_prev = jnp.ones_like(x)
        p_cur = (a - b + (a + b + 2.0) * x) * 0.5
        acc = jnp.dot(p_cur.astype(mxu_dtype), c_ref[0],
                      preferred_element_type=jnp.float32)
        for i in range(2, degree + 1):
            Ai, Bi, Ci = _jacobi_recurrence_coeffs(i, a, b)
            p_next = (Ai * x + Bi) * p_cur + Ci * p_prev
            acc = acc + jnp.dot(p_next.astype(mxu_dtype), c_ref[i - 1],
                                preferred_element_type=jnp.float32)
            p_prev, p_cur = p_cur, p_next
        acc = acc + bias_ref[...]          # degree-0 term folded into a bias
    else:
        acc = jnp.broadcast_to(bias_ref[...], o_ref.shape)
    o_ref[...] = acc.astype(o_ref.dtype)


def prepare_kan_params(jacobi_coeffs, degree, *, coeff_dtype=jnp.bfloat16):
    """One-time repack of PyTorch-layout (I, O, degree+1) coeffs into the
    per-degree (degree, I, O) layout the kernel consumes, plus the f32 bias
    that replaces the degree-0 (== 1) matmul.  Hoisted out of the per-call
    path.  Pass coeff_dtype=jnp.float32 for extra accuracy (nearly free in a
    memory-bound kernel)."""
    input_dim, output_dim, d1 = jacobi_coeffs.shape
    assert d1 == degree + 1
    c = jnp.asarray(jacobi_coeffs, jnp.float32)

    bias = jnp.sum(c[:, :, 0], axis=0).reshape(1, output_dim)   # degree-0 fold

    if degree > 0:
        coeffs = jnp.transpose(c[:, :, 1:], (2, 0, 1))          # (degree, I, O)
    else:
        coeffs = jnp.zeros((1, input_dim, output_dim), jnp.float32)  # unused
    return coeffs.astype(coeff_dtype), bias


def _pick_batch_tile(batch, input_dim, out_cols, coeff_bytes, out_itemsize,
                     vmem_budget_bytes=24 * 1024 * 1024, max_tile=8192):
    """VMEM-budget-driven batch tile.  Budget covers: double-buffered x/out
    blocks, f32 recurrence temporaries, the bf16 MXU operand and the f32
    accumulator; the resident (double-buffered) coefficient/bias block is
    subtracted from the budget first.  Only >=2 grid steps are forced (enough
    for v7x megacore); otherwise the tile is as large as the budget allows."""
    per_row = (2 * input_dim * 4            # x block, double-buffered (f32)
               + 2 * out_cols * out_itemsize  # out block, double-buffered
               + 6 * input_dim * 4          # f32 recurrence carries + slack
               + input_dim * 2              # bf16 MXU operand
               + 2 * out_cols * 4)          # f32 accumulator + slack
    budget = max(vmem_budget_bytes - 2 * coeff_bytes, 2 * 1024 * 1024)
    tile = budget // per_row
    tile = max(_SUBLANE, min(max_tile, (tile // _SUBLANE) * _SUBLANE))
    rounded_b = _round_up(max(batch, 1), _SUBLANE)
    if rounded_b > _SUBLANE:
        # Guarantee at least 2 grid steps so v7x's two TensorCores both work.
        tile = min(tile, _round_up(_cdiv(rounded_b, 2), _SUBLANE))
    tile = min(tile, rounded_b)
    return int(tile), int(per_row)


@functools.partial(
    jax.jit,
    static_argnames=("input_dim", "output_dim", "degree", "a", "b",
                     "batch_tile", "out_dtype"))
def kan_forward(x, coeffs, bias, *, input_dim, output_dim, degree,
                a=ALPHA, b=BETA, batch_tile=None, out_dtype=jnp.float32):
    """x: any shape whose flattened trailing dim is input_dim.
    Returns (B, output_dim) in out_dtype (f32 default = PyTorch semantics;
    bf16 halves HBM writeback)."""
    x2 = jnp.reshape(x, (-1, input_dim))
    B = x2.shape[0]
    out_itemsize = jnp.dtype(out_dtype).itemsize
    coeff_bytes = (coeffs.size * coeffs.dtype.itemsize
                   + bias.size * bias.dtype.itemsize)

    auto_tile, per_row = _pick_batch_tile(B, input_dim, output_dim,
                                          coeff_bytes, out_itemsize)
    if batch_tile is None:
        batch_tile = auto_tile

    B_pad = _round_up(max(B, 1), batch_tile)
    if B_pad != B:
        x2 = jnp.pad(x2, ((0, B_pad - B), (0, 0)))

    # Scoped-VMEM request sized to the actual working set (+ headroom),
    # clamped well under v7x's 64 MiB physical VMEM.
    vmem_limit = int(min(48 * 1024 * 1024,
                         max(24 * 1024 * 1024,
                             2 * coeff_bytes + per_row * batch_tile
                             + 8 * 1024 * 1024)))

    kernel = functools.partial(_kan_kernel, degree=degree,
                               a=float(a), b=float(b))

    out = pl.pallas_call(
        kernel,
        out_shape=jax.ShapeDtypeStruct((B_pad, output_dim), out_dtype),
        grid_spec=pltpu.PrefetchScalarGridSpec(
            num_scalar_prefetch=0,
            grid=(B_pad // batch_tile,),
            in_specs=[
                pl.BlockSpec((batch_tile, input_dim), lambda i: (i, 0)),
                # Grid-invariant blocks (constant index_map -> DMA'd once,
                # kept resident).
                pl.BlockSpec(coeffs.shape, lambda i: (0, 0, 0)),
                pl.BlockSpec(bias.shape, lambda i: (0, 0)),
            ],
            out_specs=pl.BlockSpec((batch_tile, output_dim), lambda i: (i, 0)),
        ),
        compiler_params=pltpu.CompilerParams(
            dimension_semantics=("parallel",),
            vmem_limit_bytes=vmem_limit),
    )(x2, coeffs, bias)

    return out[:B]


def kan_reference(x, jacobi_coeffs, *, degree, a=ALPHA, b=BETA):
    """Pure-JAX f32 mirror of the PyTorch forward, for verification."""
    input_dim = jacobi_coeffs.shape[0]
    x2 = jnp.tanh(jnp.reshape(x, (-1, input_dim)).astype(jnp.float32))
    polys = [jnp.ones_like(x2)]
    if degree > 0:
        polys.append((a - b + (a + b + 2.0) * x2) / 2.0)
    for i in range(2, degree + 1):
        A = (2 * i + a + b - 1) * (2 * i + a + b) / (2 * i * (i + a + b))
        Bc = (2 * i + a + b - 1) * (a ** 2 - b ** 2) / (
            2 * i * (i + a + b) * (2 * i + a + b - 2))
        C = -2 * (i + a - 1) * (i + b - 1) * (2 * i + a + b) / (
            2 * i * (i + a + b) * (2 * i + a + b - 2))
        polys.append((A * x2 + Bc) * polys[-1] + C * polys[-2])
    jac = jnp.stack(polys, axis=-1)  # (B, I, D+1)
    return jnp.einsum("bid,iod->bo", jac, jacobi_coeffs.astype(jnp.float32))


if __name__ == "__main__":
    input_dim = 8
    output_dim = 16
    degree = 3

    key = jax.random.PRNGKey(0)
    kx, kc = jax.random.split(key)

    # (3, 10, 8) -> flattens to (30, input_dim=8): exercises batch padding
    # and the auto-picked >=2-step grid.
    x = jax.random.normal(kx, (3, 10, input_dim), dtype=jnp.float32)

    # nn.init.normal_(std = 1 / (input_dim * (degree + 1)))
    std = 1.0 / (input_dim * (degree + 1))
    jacobi_coeffs = std * jax.random.normal(
        kc, (input_dim, output_dim, degree + 1), dtype=jnp.float32)

    # Init-time repack (hoisted out of the forward path).
    coeffs, bias = prepare_kan_params(jacobi_coeffs, degree)

    y = kan_forward(x, coeffs, bias, input_dim=input_dim,
                    output_dim=output_dim, degree=degree)
    y = jax.block_until_ready(y)
    y_ref = kan_reference(x, jacobi_coeffs, degree=degree)
    assert y.shape == (30, output_dim)
    # bf16 MXU operands with f32 accumulation -> loosened tolerance vs f32 ref.
    assert jnp.allclose(y, y_ref, atol=1e-2, rtol=1e-2), \
        float(jnp.max(jnp.abs(y - y_ref)))

    # Second check: force several grid steps to exercise the tiled/pipelined
    # path and the batch-padding logic.
    x2 = jax.random.normal(jax.random.PRNGKey(1), (6, 10, input_dim),
                           dtype=jnp.float32)
    y2 = kan_forward(x2, coeffs, bias, input_dim=input_dim,
                     output_dim=output_dim, degree=degree, batch_tile=16)
    y2 = jax.block_until_ready(y2)
    y2_ref = kan_reference(x2, jacobi_coeffs, degree=degree)
    assert y2.shape == (60, output_dim)
    assert jnp.allclose(y2, y2_ref, atol=1e-2, rtol=1e-2), \
        float(jnp.max(jnp.abs(y2 - y2_ref)))

    # Third check: bf16-output variant (halves HBM writeback).
    y3 = kan_forward(x2, coeffs, bias, input_dim=input_dim,
                     output_dim=output_dim, degree=degree,
                     out_dtype=jnp.bfloat16)
    y3 = jax.block_until_ready(y3)
    assert y3.dtype == jnp.bfloat16 and y3.shape == (60, output_dim)
    assert jnp.allclose(y3.astype(jnp.float32), y2_ref, atol=2e-2, rtol=2e-2), \
        float(jnp.max(jnp.abs(y3.astype(jnp.float32) - y2_ref)))

    print("KERNEL_OK")
</pallas_src>

<mosaic_0001>
module attributes {stable_mosaic.version = 11 : i64} {
  func.func @_kan_kernel(%arg0: i32, %arg1: memref<16x8xf32, #tpu.memory_space<vmem>>, %arg2: memref<3x8x16xbf16, #tpu.memory_space<vmem>>, %arg3: memref<1x16xf32, #tpu.memory_space<vmem>>, %arg4: memref<16x16xf32, #tpu.memory_space<vmem>>) attributes {dimension_semantics = [#tpu.dimension_semantics<parallel>], iteration_bounds = array<i64: 2>, scalar_prefetch = 0 : i64, scratch_operands = 0 : i64, tpu.core_type = #tpu.core_type<tc>, window_params = [{transform_indices = @transform_0, window_bounds = array<i64: 16, 8>}, {pipeline_mode = #tpu.pipeline_mode<synchronous>, transform_indices = @transform_1, window_bounds = array<i64: 3, 8, 16>}, {pipeline_mode = #tpu.pipeline_mode<synchronous>, transform_indices = @transform_2, window_bounds = array<i64: 1, 16>}, {transform_indices = @transform_3, window_bounds = array<i64: 16, 16>}]} {
    %c0 = arith.constant 0 : index
    %c0_0 = arith.constant 0 : index
    %0 = vector.load %arg1[%c0, %c0_0] : memref<16x8xf32, #tpu.memory_space<vmem>>, vector<16x8xf32>
    %1 = math.tanh %0 : vector<16x8xf32>
    %cst = arith.constant 1.000000e+00 : f32
    %2 = vector.broadcast %cst : f32 to vector<16x8xf32>
    %cst_1 = arith.constant 1.000000e+00 : f32
    %3 = vector.broadcast %cst_1 : f32 to vector<16x8xf32>
    %4 = arith.mulf %3, %1 : vector<16x8xf32>
    %cst_2 = arith.constant 0.000000e+00 : f32
    %5 = vector.broadcast %cst_2 : f32 to vector<16x8xf32>
    %6 = arith.addf %5, %4 : vector<16x8xf32>
    %cst_3 = arith.constant 5.000000e-01 : f32
    %7 = vector.broadcast %cst_3 : f32 to vector<16x8xf32>
    %8 = arith.mulf %6, %7 : vector<16x8xf32>
    %9 = arith.truncf %8 : vector<16x8xf32> to vector<16x8xbf16>
    %c0_4 = arith.constant 0 : index
    %c0_5 = arith.constant 0 : index
    %c0_6 = arith.constant 0 : index
    %10 = vector.load %arg2[%c0_4, %c0_5, %c0_6] : memref<3x8x16xbf16, #tpu.memory_space<vmem>>, vector<1x8x16xbf16>
    %11 = vector.shape_cast %10 : vector<1x8x16xbf16> to vector<8x16xbf16>
    %cst_7 = arith.constant dense<0.000000e+00> : vector<16x16xf32>
    %12 = tpu.matmul %9, %11, %cst_7 {dimension_numbers = #tpu.dot_dimension_numbers<[1], [0], [0], [1], [0, 0, 1, 1], [], []>} : vector<16x8xbf16>, vector<8x16xbf16>, vector<16x16xf32> -> vector<16x16xf32>
    %cst_8 = arith.constant 1.500000e+00 : f32
    %13 = vector.broadcast %cst_8 : f32 to vector<16x8xf32>
    %14 = arith.mulf %13, %1 : vector<16x8xf32>
    %cst_9 = arith.constant 0.000000e+00 : f32
    %15 = vector.broadcast %cst_9 : f32 to vector<16x8xf32>
    %16 = arith.addf %14, %15 : vector<16x8xf32>
    %17 = arith.mulf %16, %8 : vector<16x8xf32>
    %cst_10 = arith.constant -3.750000e-01 : f32
    %18 = vector.broadcast %cst_10 : f32 to vector<16x8xf32>
    %19 = arith.mulf %18, %2 : vector<16x8xf32>
    %20 = arith.addf %17, %19 : vector<16x8xf32>
    %21 = arith.truncf %20 : vector<16x8xf32> to vector<16x8xbf16>
    %c1 = arith.constant 1 : index
    %c0_11 = arith.constant 0 : index
    %c0_12 = arith.constant 0 : index
    %22 = vector.load %arg2[%c1, %c0_11, %c0_12] : memref<3x8x16xbf16, #tpu.memory_space<vmem>>, vector<1x8x16xbf16>
    %23 = vector.shape_cast %22 : vector<1x8x16xbf16> to vector<8x16xbf16>
    %cst_13 = arith.constant dense<0.000000e+00> : vector<16x16xf32>
    %24 = tpu.matmul %21, %23, %cst_13 {dimension_numbers = #tpu.dot_dimension_numbers<[1], [0], [0], [1], [0, 0, 1, 1], [], []>} : vector<16x8xbf16>, vector<8x16xbf16>, vector<16x16xf32> -> vector<16x16xf32>
    %25 = arith.addf %12, %24 : vector<16x16xf32>
    %cst_14 = arith.constant 1.66666663 : f32
    %26 = vector.broadcast %cst_14 : f32 to vector<16x8xf32>
    %27 = arith.mulf %26, %1 : vector<16x8xf32>
    %cst_15 = arith.constant 0.000000e+00 : f32
    %28 = vector.broadcast %cst_15 : f32 to vector<16x8xf32>
    %29 = arith.addf %27, %28 : vector<16x8xf32>
    %30 = arith.mulf %29, %20 : vector<16x8xf32>
    %cst_16 = arith.constant -6.250000e-01 : f32
    %31 = vector.broadcast %cst_16 : f32 to vector<16x8xf32>
    %32 = arith.mulf %31, %8 : vector<16x8xf32>
    %33 = arith.addf %30, %32 : vector<16x8xf32>
    %34 = arith.truncf %33 : vector<16x8xf32> to vector<16x8xbf16>
    %c2 = arith.constant 2 : index
    %c0_17 = arith.constant 0 : index
    %c0_18 = arith.constant 0 : index
    %35 = vector.load %arg2[%c2, %c0_17, %c0_18] : memref<3x8x16xbf16, #tpu.memory_space<vmem>>, vector<1x8x16xbf16>
    %36 = vector.shape_cast %35 : vector<1x8x16xbf16> to vector<8x16xbf16>
    %cst_19 = arith.constant dense<0.000000e+00> : vector<16x16xf32>
    %37 = tpu.matmul %34, %36, %cst_19 {dimension_numbers = #tpu.dot_dimension_numbers<[1], [0], [0], [1], [0, 0, 1, 1], [], []>} : vector<16x8xbf16>, vector<8x16xbf16>, vector<16x16xf32> -> vector<16x16xf32>
    %38 = arith.addf %25, %37 : vector<16x16xf32>
    %c0_20 = arith.constant 0 : index
    %c0_21 = arith.constant 0 : index
    %39 = vector.load %arg3[%c0_20, %c0_21] : memref<1x16xf32, #tpu.memory_space<vmem>>, vector<1x16xf32>
    %40 = vector.broadcast %39 : vector<1x16xf32> to vector<16x16xf32>
    %41 = arith.addf %38, %40 : vector<16x16xf32>
    %c0_22 = arith.constant 0 : index
    %c0_23 = arith.constant 0 : index
    %42 = vector.load %arg4[%c0_22, %c0_23] : memref<16x16xf32, #tpu.memory_space<vmem>>, vector<16x16xf32>
    tpu.vector_store %arg4[%c0_22, %c0_23], %41 {strides = array<i32>} : memref<16x16xf32, #tpu.memory_space<vmem>>, vector<16x16xf32>,
    return
  }
  func.func @transform_0(%arg0: i32) -> (i32, i32) {
    %c0_i32 = arith.constant 0 : i32
    %c0_i32_0 = arith.constant 0 : i32
    return %arg0, %c0_i32 : i32, i32
  }
  func.func @transform_1(%arg0: i32) -> (i32, i32, i32) {
    %c0_i32 = arith.constant 0 : i32
    %c0_i32_0 = arith.constant 0 : i32
    %c0_i32_1 = arith.constant 0 : i32
    %c0_i32_2 = arith.constant 0 : i32
    return %c0_i32, %c0_i32_0, %c0_i32_1 : i32, i32, i32
  }
  func.func @transform_2(%arg0: i32) -> (i32, i32) {
    %c0_i32 = arith.constant 0 : i32
    %c0_i32_0 = arith.constant 0 : i32
    %c0_i32_1 = arith.constant 0 : i32
    return %c0_i32, %c0_i32_0 : i32, i32
  }
  func.func @transform_3(%arg0: i32) -> (i32, i32) {
    %c0_i32 = arith.constant 0 : i32
    %c0_i32_0 = arith.constant 0 : i32
    return %arg0, %c0_i32 : i32, i32
  }
}

</mosaic_0001>

<llo_original>
// kernel: kan_forward.1
$region0: #{kan_forward.1}
  #allocation0 [shape = 'u32[]', space=smem, size = 0x4, offset = 0x4, fixed_abs, tag = 'smem constant byte address 0x4 - core index']
  #allocation1 [shape = 'u32[144,128]{1,0:T(1,128)}', space=vmem, size = 0x12000, scoped, tag = 'internal scratch']
  %s0 = inlined_call_operand.vmem [shape: f32[32,8], index: 0, kind: input, shape index: {}]
  %s1 = inlined_call_operand.vmem [shape: bf16[3,8,16], index: 1, kind: input, shape index: {}]
  %s2 = inlined_call_operand.vmem [shape: f32[1,16], index: 2, kind: input, shape index: {}]
  %s3 = inlined_call_operand.vmem [shape: f32[32,16], index: 3, kind: output, shape index: {}]
  %s4 = sld [smem:[#allocation0]]
  $region45: #{kan_forward.1} parent=0
    _
  %s6 = ssub.s32 1, %s4
  %s7 = scalar_select 0, %s6, %s4
  loop: start=0, step=1, limit=4
  $region2: #{kan_forward.1} parent=0 // loop_pre_header
    _
  $region3: #{kan_forward.1} parent=0 // loop_header
    %s9 = sphi 0, %s13
    %p10 = scmp.ge.s32.totalorder %s9, 4
    %s19 = sphi 0, %s21
    %s22 = sphi 0, %s19
    %s23 = sphi 0, %s22
    %s39 = sphi 0, %s23
    %s43 = sphi 0, %s43
    %s45 = sphi 0, %s43
    %s46 = sphi 0, %s45
    %s60 = sphi 0, %s46
    %s64 = sphi 0, %s64
    %s66 = sphi 0, %s64
    %s67 = sphi 0, %s66
    %s81 = sphi 0, %s67
    %s87 = sphi 0, %s89
    %s90 = sphi 0, %s87
    %s91 = sphi 0, %s90
    %s107 = sphi 0, %s91
  $region4: #{kan_forward.1} parent=0 // loop_header_branch
    %12 = sbr.rel (%p10) target = $region8
  $region5: #{kan_forward.1} parent=0 // loop_body
    %s14 = ssub.s32 %s9, 1
    %s15 = ssub.s32 %s9, 2
    %s16 = sadd.s32 %s9, 1
    %s17 = ssub.s32 %s9, %s16
    %p18 = scmp.eq.s32.totalorder %s17, 0
    %s20 = sadd.s32 %s19, 1
    %s21 = scalar_select %p18, %s19, %s20
    %p24 = pneg %p18
    %p25 = scmp.eq.s32.totalorder %s9, 1
    %p26 = por %p24, %p25
    %p27 = scmp.ne.s32.totalorder %s19, %s22
    %p28 = scmp.eq.s32.totalorder %s9, 0
    %p29 = por %p27, %p28
    %p30 = scmp.ne.s32.totalorder %s19, %s22
    %p31 = scmp.eq.s32.totalorder %s14, 1
    %p32 = por %p30, %p31
    %p33 = scmp.ne.s32.totalorder %s22, %s23
    %p34 = scmp.eq.s32.totalorder %s14, 0
    %p35 = por %p33, %p34
    %p36 = scmp.ne.s32.totalorder %s22, %s23
    %p37 = scmp.eq.s32.totalorder %s15, 1
    %p38 = por %p36, %p37
    %p40 = scmp.ne.s32.totalorder %s23, %s39
    %p41 = scmp.eq.s32.totalorder %s15, 0
    %p42 = por %p40, %p41
    %s44 = sadd.s32 %s43, 1
    %p47 = scmp.eq.s32.totalorder %s9, 1
    %p48 = scmp.ne.s32.totalorder %s43, %s45
    %p49 = scmp.eq.s32.totalorder %s9, 0
    %p50 = por %p48, %p49
    %p51 = scmp.ne.s32.totalorder %s43, %s45
    %p52 = scmp.eq.s32.totalorder %s14, 1
    %p53 = por %p51, %p52
    %p54 = scmp.ne.s32.totalorder %s45, %s46
    %p55 = scmp.eq.s32.totalorder %s14, 0
    %p56 = por %p54, %p55
    %p57 = scmp.ne.s32.totalorder %s45, %s46
    %p58 = scmp.eq.s32.totalorder %s15, 1
    %p59 = por %p57, %p58
    %p61 = scmp.ne.s32.totalorder %s46, %s60
    %p62 = scmp.eq.s32.totalorder %s15, 0
    %p63 = por %p61, %p62
    %s65 = sadd.s32 %s64, 1
    %p68 = scmp.eq.s32.totalorder %s9, 1
    %p69 = scmp.ne.s32.totalorder %s64, %s66
    %p70 = scmp.eq.s32.totalorder %s9, 0
    %p71 = por %p69, %p70
    %p72 = scmp.ne.s32.totalorder %s64, %s66
    %p73 = scmp.eq.s32.totalorder %s14, 1
    %p74 = por %p72, %p73
    %p75 = scmp.ne.s32.totalorder %s66, %s67
    %p76 = scmp.eq.s32.totalorder %s14, 0
    %p77 = por %p75, %p76
    %p78 = scmp.ne.s32.totalorder %s66, %s67
    %p79 = scmp.eq.s32.totalorder %s15, 1
    %p80 = por %p78, %p79
    %p82 = scmp.ne.s32.totalorder %s67, %s81
    %p83 = scmp.eq.s32.totalorder %s15, 0
    %p84 = por %p82, %p83
    %s85 = ssub.s32 %s9, %s16
    %p86 = scmp.eq.s32.totalorder %s85, 0
    %s88 = sadd.s32 %s87, 1
    %s89 = scalar_select %p86, %s87, %s88
    %p92 = pneg %p86
    %p93 = scmp.eq.s32.totalorder %s9, 1
    %p94 = por %p92, %p93
    %p95 = scmp.ne.s32.totalorder %s87, %s90
    %p96 = scmp.eq.s32.totalorder %s9, 0
    %p97 = por %p95, %p96
    %p98 = scmp.ne.s32.totalorder %s87, %s90
    %p99 = scmp.eq.s32.totalorder %s14, 1
    %p100 = por %p98, %p99
    %p101 = scmp.ne.s32.totalorder %s90, %s91
    %p102 = scmp.eq.s32.totalorder %s14, 0
    %p103 = por %p101, %p102
    %p104 = scmp.ne.s32.totalorder %s90, %s91
    %p105 = scmp.eq.s32.totalorder %s15, 1
    %p106 = por %p104, %p105
    %p108 = scmp.ne.s32.totalorder %s91, %s107
    %p109 = scmp.eq.s32.totalorder %s15, 0
    %p110 = por %p108, %p109
    %p111 = scmp.le.s32.totalorder 1, %s9
    %p112 = scmp.lt.s32.totalorder %s9, 3
    %p113 = pnand %p111, %p112
    %p114 = pneg %p113
    // Predicated region
    $region9: #{kan_forward.1} parent=5 // pred_check
      _
    $region10: #{kan_forward.1} parent=5 // pred_check_branch
      %116 = sbr.rel (%p113) target = $region12
    $region11: #{kan_forward.1} parent=5 // pred_region
      %s117 = ssub.s32 %s9, 1
      // Predicated region
      $region13: #{kan_forward.1} parent=11 // pred_check
        %p118 = pneg %p56
      $region14: #{kan_forward.1} parent=11 // pred_check_branch
        %120 = sbr.rel (%p118) target = $region16
      $region15: #{kan_forward.1} parent=11 // pred_region
        _
      $region16: #{kan_forward.1} parent=11 // pred_fallthru
        _
      // Predicated region
      $region17: #{kan_forward.1} parent=11 // pred_check
        %p121 = pneg %p77
      $region18: #{kan_forward.1} parent=11 // pred_check_branch
        %123 = sbr.rel (%p121) target = $region20
      $region19: #{kan_forward.1} parent=11 // pred_region
        _
      $region20: #{kan_forward.1} parent=11 // pred_fallthru
        _
    $region12: #{kan_forward.1} parent=5 // pred_fallthru
      _
    %p124 = scmp.lt.s32.totalorder %s9, 2
    // Predicated region
    $region21: #{kan_forward.1} parent=5 // pred_check
      %p125 = pneg %p124
    $region22: #{kan_forward.1} parent=5 // pred_check_branch
      %127 = sbr.rel (%p125) target = $region24
    $region23: #{kan_forward.1} parent=5 // pred_region
      // Predicated region
      $region25: #{kan_forward.1} parent=23 // pred_check
        %p128 = pneg %p29
      $region26: #{kan_forward.1} parent=23 // pred_check_branch
        %130 = sbr.rel (%p128) target = $region28
      $region27: #{kan_forward.1} parent=23 // pred_region
        %s131 = smul.u32 2, %s9
        %p132 = scmp.lt.s32.totalorder %s131, 3
        %s133 = scalar_select %p132, %s131, 3
        %s134 = smul.addr %s133, 8
        %s135 = scalar_lea.vmem %s0, %s134
        %s136 = smul.u32 2, %s9
      $region28: #{kan_forward.1} parent=23 // pred_fallthru
        _
    $region24: #{kan_forward.1} parent=5 // pred_fallthru
      _
    %p137 = scmp.le.s32.totalorder 1, %s9
    %p138 = scmp.lt.s32.totalorder %s9, 3
    %p139 = pnand %p137, %p138
    %p140 = pneg %p139
    // Predicated region
    $region29: #{kan_forward.1} parent=5 // pred_check
      _
    $region30: #{kan_forward.1} parent=5 // pred_check_branch
      %142 = sbr.rel (%p139) target = $region32
    $region31: #{kan_forward.1} parent=5 // pred_region
      %s143 = ssub.s32 %s9, 1
      %s144 = smul.u32 2, %s14
      %p145 = scmp.lt.s32.totalorder %s144, 3
      %s146 = scalar_select %p145, %s144, 3
      %s147 = smul.addr %s146, 8
      %s148 = scalar_lea.vmem %s0, %s147
      %p149 = pneg %p35
      %p150 = pneg %p32
      %p151 = pneg %p56
      %p152 = pneg %p53
      %p153 = pneg %p77
      %p154 = pneg %p74
      %p155 = pneg %p103
      %p156 = pneg %p100
      %s157 = smul.u32 2, %s14
      %p158 = scmp.lt.s32.totalorder %s157, 3
      %s159 = scalar_select %p158, %s157, 3
      %s160 = smul.addr %s159, 8
      %s161 = scalar_lea.vmem %s3, %s160
      %s162 = smul.u32 2, %s14
      %p163 = scmp.lt.s32.totalorder %s162, 3
      %s164 = scalar_select %p163, %s162, 3
      %s165 = smul.addr %s164, 8
      %s166 = scalar_lea.vmem %s0, %s165
      %s167 = smul.u32 2, %s14
      %s168 = smul.u32 2, %s14
      %p169 = scmp.lt.s32.totalorder %s168, 3
      %s170 = scalar_select %p169, %s168, 3
      %s171 = smul.addr %s170, 8
      %s172 = scalar_lea.vmem %s3, %s171
      %s173 = smul.u32 2, %s14
      %v175 = vld [vmem:[%s166] sm:$0xff]
      %v176 = vld [vmem:[%s166 + $0x8] sm:$0xff]
      %v177 = vtanh.pop %v175
      %v178 = vtanh.pop %v176
      %v179 = vadd.f32 %v177, 0.0
      %v180 = vadd.f32 %v178, 0.0
      %v181 = vmul.f32 %v179, 0.5
      %v182 = vmul.f32 %v180, 0.5
      %v183 = vpack.c.bf16 %v182, %v181
      %v184 = vld [vmem:[%s1] sm:$0xf]
      %v185 = vmul.f32 %v177, 1.5
      %v186 = vmul.f32 %v178, 1.5
      %v187 = vadd.f32 %v185, 0.0
      %v188 = vadd.f32 %v186, 0.0
      %v189 = vmul.f32 %v187, %v181
      %v190 = vmul.f32 %v188, %v182
      %v191 = vadd.f32 %v189, -0.375
      %v192 = vadd.f32 %v190, -0.375
      %v193 = vpack.c.bf16 %v192, %v191
      %s194 = scalar_lea.vmem %s1, 4
      %v195 = vld [vmem:[%s194] sm:$0xf]
      %vm196 = vcmask 64512
      %v198 = vsel %vm196, %v193, 0
      %vm200 = vcmask 1043456
      %v202 = vsel %vm200, %v195, 0
      %204 = vmatprep.subr.bf16.mxu0 0
      %205 = vmatpush1.bf16.msra.mxu0 %v202
      %206 = vmatprep.subr.bf16.mxu0 0
      %207 = vmatpush1.bf16.msra.mxu0 0
      %208 = vmatprep.subr.bf16.mxu0 0
      %209 = vmatpush1.bf16.msra.mxu0 0
      %210 = vmatprep.subr.bf16.mxu0 0
      %211 = vmatpush1.bf16.msra.mxu0 0
      %212 = vmatprep.subr.bf16.mxu0 0
      %213 = vmatpush1.bf16.msra.mxu0 0
      %214 = vmatprep.subr.bf16.mxu0 0
      %215 = vmatpush1.bf16.msra.mxu0 0
      %216 = vmatprep.subr.bf16.mxu0 0
      %217 = vmatpush1.bf16.msra.mxu0 0
      %218 = vmatprep.subr.bf16.mxu0 0
      %219 = vmatpush1.bf16.msra.mxu0 0
      %220 = vmatprep.subr.bf16.mxu0 0
      %221 = vmatpush1.bf16.msra.mxu0 0
      %222 = vmatprep.subr.bf16.mxu0 0
      %223 = vmatpush1.bf16.msra.mxu0 0
      %224 = vmatprep.subr.bf16.mxu0 0
      %225 = vmatpush1.bf16.msra.mxu0 0
      %226 = vmatprep.subr.bf16.mxu0 0
      %227 = vmatpush1.bf16.msra.mxu0 0
      %228 = vmatprep.subr.bf16.mxu0 0
      %229 = vmatpush1.bf16.msra.mxu0 0
      %230 = vmatprep.subr.bf16.mxu0 0
      %231 = vmatpush1.bf16.msra.mxu0 0
      %232 = vmatprep.subr.bf16.mxu0 0
      %233 = vmatpush1.bf16.msra.mxu0 0
      %234 = vmatprep.subr.bf16.mxu0 0
      %235 = vmatpush1.bf16.msra.mxu0 0
      %236 = vmatprep.mubr.bf16.mxu0 0
      %237 = vmatmul.mubr.bf16.gmra.mrb[0].mxu0 %v198
      %v238 = vpop.f32.mrb[0].mxu0
      %v239 = vadd.f32 0.0, %v238
      %v240 = vpop.f32.mrb[0].mxu0
      %v241 = vpop.f32.mrb[0].mxu0
      %v242 = vadd.f32 0.0, %v241
      %v243 = vpop.f32.mrb[0].mxu0
      %244 = vdwg.mxu0
      %v246 = vsel %vm196, %v183, 0
      %v249 = vsel %vm200, %v184, 0
      %251 = vmatprep.subr.bf16.mxu0 0
      %252 = vmatpush1.bf16.msra.mxu0 %v249
      %253 = vmatprep.subr.bf16.mxu0 0
      %254 = vmatpush1.bf16.msra.mxu0 0
      %255 = vmatprep.subr.bf16.mxu0 0
      %256 = vmatpush1.bf16.msra.mxu0 0
      %257 = vmatprep.subr.bf16.mxu0 0
      %258 = vmatpush1.bf16.msra.mxu0 0
      %259 = vmatprep.subr.bf16.mxu0 0
      %260 = vmatpush1.bf16.msra.mxu0 0
      %261 = vmatprep.subr.bf16.mxu0 0
      %262 = vmatpush1.bf16.msra.mxu0 0
      %263 = vmatprep.subr.bf16.mxu0 0
      %264 = vmatpush1.bf16.msra.mxu0 0
      %265 = vmatprep.subr.bf16.mxu0 0
      %266 = vmatpush1.bf16.msra.mxu0 0
      %267 = vmatprep.subr.bf16.mxu0 0
      %268 = vmatpush1.bf16.msra.mxu0 0
      %269 = vmatprep.subr.bf16.mxu0 0
      %270 = vmatpush1.bf16.msra.mxu0 0
      %271 = vmatprep.subr.bf16.mxu0 0
      %272 = vmatpush1.bf16.msra.mxu0 0
      %273 = vmatprep.subr.bf16.mxu0 0
      %274 = vmatpush1.bf16.msra.mxu0 0
      %275 = vmatprep.subr.bf16.mxu0 0
      %276 = vmatpush1.bf16.msra.mxu0 0
      %277 = vmatprep.subr.bf16.mxu0 0
      %278 = vmatpush1.bf16.msra.mxu0 0
      %279 = vmatprep.subr.bf16.mxu0 0
      %280 = vmatpush1.bf16.msra.mxu0 0
      %281 = vmatprep.subr.bf16.mxu0 0
      %282 = vmatpush1.bf16.msra.mxu0 0
      %283 = vmatprep.mubr.bf16.mxu0 0
      %284 = vmatmul.mubr.bf16.gmra.mrb[0].mxu0 %v246
      %v285 = vpop.f32.mrb[0].mxu0
      %v286 = vadd.f32 %v239, %v285
      %v287 = vpop.f32.mrb[0].mxu0
      %v288 = vpop.f32.mrb[0].mxu0
      %v289 = vadd.f32 %v242, %v288
      %v290 = vpop.f32.mrb[0].mxu0
      %291 = vdwg.mxu0
      %v292 = vmul.f32 %v177, 1.6666666
      %v293 = vmul.f32 %v178, 1.6666666
      %v294 = vadd.f32 %v292, 0.0
      %v295 = vadd.f32 %v293, 0.0
      %v296 = vmul.f32 %v294, %v191
      %v297 = vmul.f32 %v295, %v192
      %v298 = vmul.f32 %v181, -0.625
      %v299 = vmul.f32 %v182, -0.625
      %v300 = vadd.f32 %v296, %v298
      %v301 = vadd.f32 %v297, %v299
      %v302 = vpack.c.bf16 %v301, %v300
      %s303 = scalar_lea.vmem %s1, 8
      %v304 = vld [vmem:[%s303] sm:$0xf]
      %v306 = vsel %vm196, %v302, 0
      %v309 = vsel %vm200, %v304, 0
      %311 = vmatprep.subr.bf16.mxu0 0
      %312 = vmatpush1.bf16.msra.mxu0 %v309
      %313 = vmatprep.subr.bf16.mxu0 0
      %314 = vmatpush1.bf16.msra.mxu0 0
      %315 = vmatprep.subr.bf16.mxu0 0
      %316 = vmatpush1.bf16.msra.mxu0 0
      %317 = vmatprep.subr.bf16.mxu0 0
      %318 = vmatpush1.bf16.msra.mxu0 0
      %319 = vmatprep.subr.bf16.mxu0 0
      %320 = vmatpush1.bf16.msra.mxu0 0
      %321 = vmatprep.subr.bf16.mxu0 0
      %322 = vmatpush1.bf16.msra.mxu0 0
      %323 = vmatprep.subr.bf16.mxu0 0
      %324 = vmatpush1.bf16.msra.mxu0 0
      %325 = vmatprep.subr.bf16.mxu0 0
      %326 = vmatpush1.bf16.msra.mxu0 0
      %327 = vmatprep.subr.bf16.mxu0 0
      %328 = vmatpush1.bf16.msra.mxu0 0
      %329 = vmatprep.subr.bf16.mxu0 0
      %330 = vmatpush1.bf16.msra.mxu0 0
      %331 = vmatprep.subr.bf16.mxu0 0
      %332 = vmatpush1.bf16.msra.mxu0 0
      %333 = vmatprep.subr.bf16.mxu0 0
      %334 = vmatpush1.bf16.msra.mxu0 0
      %335 = vmatprep.subr.bf16.mxu0 0
      %336 = vmatpush1.bf16.msra.mxu0 0
      %337 = vmatprep.subr.bf16.mxu0 0
      %338 = vmatpush1.bf16.msra.mxu0 0
      %339 = vmatprep.subr.bf16.mxu0 0
      %340 = vmatpush1.bf16.msra.mxu0 0
      %341 = vmatprep.subr.bf16.mxu0 0
      %342 = vmatpush1.bf16.msra.mxu0 0
      %343 = vmatprep.mubr.bf16.mxu0 0
      %344 = vmatmul.mubr.bf16.gmra.mrb[0].mxu0 %v306
      %v345 = vpop.f32.mrb[0].mxu0
      %v346 = vadd.f32 0.0, %v345
      %v347 = vpop.f32.mrb[0].mxu0
      %v348 = vpop.f32.mrb[0].mxu0
      %v349 = vadd.f32 0.0, %v348
      %v350 = vpop.f32.mrb[0].mxu0
      %351 = vdwg.mxu0
      %v352 = vadd.f32 %v286, %v346
      %v353 = vadd.f32 %v289, %v349
      %v354 = vld [vmem:[%s2] sm:$0x1]
      %v356 = vlaneseq
      %v357 = vshrl.u32 %v356, 7
      %v358 = vsub.s32 0, %v357
      %v359 = vrot.slane %v354, %v358
      %v361 = vadd.f32 %v352, %v359
      %v362 = vadd.f32 %v353, %v359
      %vm363 = vcmask 130048
      %364 = vst.msk [vmem:[%s172] sm:$0xff] %vm363, %v361
      %365 = vst.msk [vmem:[%s172 + $0x8] sm:$0xff] %vm363, %v362
      %s366 = smul.u32 2, %s14
      %p367 = scmp.lt.s32.totalorder %s366, 3
      %s368 = scalar_select %p367, %s366, 3
      %s369 = smul.addr %s368, 8
      %s370 = scalar_lea.vmem %s3, %s369
      // Predicated region
      $region33: #{kan_forward.1} parent=31 // pred_check
        %p371 = pneg %p100
      $region34: #{kan_forward.1} parent=31 // pred_check_branch
        %373 = sbr.rel (%p371) target = $region36
      $region35: #{kan_forward.1} parent=31 // pred_region
        %s374 = smul.u32 2, %s14
      $region36: #{kan_forward.1} parent=31 // pred_fallthru
        _
    $region32: #{kan_forward.1} parent=5 // pred_fallthru
      _
    %p375 = scmp.le.s32.totalorder 2, %s9
    // Predicated region
    $region37: #{kan_forward.1} parent=5 // pred_check
      %p376 = pneg %p375
    $region38: #{kan_forward.1} parent=5 // pred_check_branch
      %378 = sbr.rel (%p376) target = $region40
    $region39: #{kan_forward.1} parent=5 // pred_region
      %s379 = ssub.s32 %s9, 2
      // Predicated region
      $region41: #{kan_forward.1} parent=39 // pred_check
        %p380 = pneg %p106
      $region42: #{kan_forward.1} parent=39 // pred_check_branch
        %382 = sbr.rel (%p380) target = $region44
      $region43: #{kan_forward.1} parent=39 // pred_region
        %s383 = smul.u32 2, %s15
        %p384 = scmp.lt.s32.totalorder %s383, 3
        %s385 = scalar_select %p384, %s383, 3
        %s386 = smul.addr %s385, 8
        %s387 = scalar_lea.vmem %s3, %s386
      $region44: #{kan_forward.1} parent=39 // pred_fallthru
        _
    $region40: #{kan_forward.1} parent=5 // pred_fallthru
      _
  $region6: #{kan_forward.1} parent=0 // loop_footer
    %s13 = sadd.s32 1, %s9
  $region7: #{kan_forward.1} parent=0 // loop_footer_branch
    %8 = sbr.rel target = $region3
  $region8: #{kan_forward.1} parent=0 // loop_exit
    _

</llo_original>
